<compile_context>
chip_gen: v7x
topology: tpu7x:2x2x1
jax: 0.10.0
libtpu: 0.0.40
codegen_flags: <defaults>
</compile_context>

<pallas_src>
import functools

import jax
import jax.numpy as jnp
from jax.experimental import pallas as pl
from jax.experimental.pallas import tpu as pltpu


def _lstm_kernel(x_ref, w_ih_ref, w_hh_ref, b_ref, w_fc_ref, b_fc_ref,
                 out_ref, *, batch, seq_len, hidden_size):
    B, T, H = batch, seq_len, hidden_size

    # ---- One big MXU matmul for the (non-recurrent) input projection, bias folded in once.
    # Row t*B + b  ==  x[b, t, :] @ W_ih^T + (b_ih + b_hh).  Kept as a value (T*B, 4H) f32;
    # at this size that is only 8 vregs, so no VMEM scratch round-trip is needed.
    xw = jnp.dot(x_ref[...], w_ih_ref[...],
                 preferred_element_type=jnp.float32) + b_ref[...]

    w_hh = w_hh_ref[...]                       # (H, 4H), loaded once, hoisted
    mm_dtype = w_hh.dtype                      # bf16 in the fast path, f32 for exact mode

    h = jnp.zeros((B, H), jnp.float32)
    c = jnp.zeros((B, H), jnp.float32)

    # Static Python unroll (T is small here).  For large T, switch back to the
    # VMEM-scratch variant with lax.fori_loop(..., unroll=8) to cap code size / vreg
    # live ranges (review item: cap the unroll for production T).
    for t in range(T):
        # Only matmul on the recurrent critical path: (B, H) @ (H, 4H), f32 accumulate.
        gates = xw[t * B:(t + 1) * B, :] + jnp.dot(
            h.astype(mm_dtype), w_hh, preferred_element_type=jnp.float32)
        # Whole-vreg transcendentals (full 128 lanes on the EUP), then static lane slices.
        sig = jax.nn.sigmoid(gates)
        th = jnp.tanh(gates)
        i = sig[:, 0 * H:1 * H]
        f = sig[:, 1 * H:2 * H]
        g = th[:, 2 * H:3 * H]
        o = sig[:, 3 * H:4 * H]
        c = f * c + i * g                       # f32 VPU math throughout
        h = o * jnp.tanh(c)

    # relu(lstm_out[:, -1, :]) @ W_fc^T + b_fc, fused (tiny, off the serial loop).
    h_relu = jnp.maximum(h, 0.0)
    out_ref[...] = (jnp.dot(h_relu, w_fc_ref[...],
                            preferred_element_type=jnp.float32)
                    + b_fc_ref[...]).astype(out_ref.dtype)


def lstm_model_forward(x, params, *, matmul_dtype=jnp.float32):
    """x: (B, T, D_in) float32 -> (B, output_size) float32.

    matmul_dtype=jnp.bfloat16 feeds the MXU its native bf16 path (f32 accumulate,
    f32 carries/gates) per the perf review; jnp.float32 reproduces PyTorch exactly.
    """
    B, T, D = x.shape
    H = params["w_hh_t"].shape[0]
    O = params["w_fc_t"].shape[1]

    # Layout plumbing only: rows ordered (t, b) so each timestep is a contiguous,
    # sublane-aligned (B, 4H) block of the in-kernel input projection.
    x_flat = jnp.transpose(x, (1, 0, 2)).reshape(T * B, D).astype(matmul_dtype)
    w_ih = params["w_ih_t"].astype(matmul_dtype)
    w_hh = params["w_hh_t"].astype(matmul_dtype)

    kernel = functools.partial(_lstm_kernel, batch=B, seq_len=T, hidden_size=H)

    return pl.pallas_call(
        kernel,
        out_shape=jax.ShapeDtypeStruct((B, O), jnp.float32),
        grid_spec=pltpu.PrefetchScalarGridSpec(
            num_scalar_prefetch=0,
            grid=(1,),                                          # time loop is in-kernel
            in_specs=[
                pl.BlockSpec((T * B, D), lambda i: (0, 0)),     # x, all timesteps resident
                pl.BlockSpec((D, 4 * H), lambda i: (0, 0)),     # W_ih^T
                pl.BlockSpec((H, 4 * H), lambda i: (0, 0)),     # W_hh^T
                pl.BlockSpec((1, 4 * H), lambda i: (0, 0)),     # b_ih + b_hh (f32)
                pl.BlockSpec((H, O), lambda i: (0, 0)),         # W_fc^T (f32)
                pl.BlockSpec((1, O), lambda i: (0, 0)),         # b_fc (f32)
            ],
            out_specs=pl.BlockSpec((B, O), lambda i: (0, 0)),
        ),
        # Default scoped VMEM is ample at this size; set vmem_limit_bytes (with headroom,
        # less aggressively on v7x's 64 MiB) once resident buffers grow.
        compiler_params=pltpu.CompilerParams(
            dimension_semantics=("arbitrary",)),
    )(x_flat, w_ih, w_hh, params["b"], params["w_fc_t"], params["b_fc"])


def init_params(key, input_size, hidden_size, output_size):
    """Deterministic init matching the PyTorch parameter shapes
    (weights stored already transposed for the kernel)."""
    k = jax.random.split(key, 6)
    s = 1.0 / jnp.sqrt(hidden_size)
    u = lambda kk, shape: jax.random.uniform(kk, shape, jnp.float32, -s, s)
    w_ih = u(k[0], (4 * hidden_size, input_size))     # PyTorch weight_ih_l0
    w_hh = u(k[1], (4 * hidden_size, hidden_size))    # PyTorch weight_hh_l0
    b_ih = u(k[2], (4 * hidden_size,))
    b_hh = u(k[3], (4 * hidden_size,))
    w_fc = u(k[4], (output_size, hidden_size))        # PyTorch fc.weight
    b_fc = u(k[5], (output_size,))
    return {
        "w_ih_t": w_ih.T,                             # (D_in, 4H)
        "w_hh_t": w_hh.T,                             # (H, 4H)
        "b": (b_ih + b_hh).reshape(1, 4 * hidden_size),
        "w_fc_t": w_fc.T,                             # (H, O)
        "b_fc": b_fc.reshape(1, output_size),
    }


def reference_forward(x, params):
    """Pure-JAX f32 reference with the PyTorch module's semantics (gate order i,f,g,o)."""
    B, T, D = x.shape
    H = params["w_hh_t"].shape[0]
    h = jnp.zeros((B, H), jnp.float32)
    c = jnp.zeros((B, H), jnp.float32)
    for t in range(T):
        gates = x[:, t, :] @ params["w_ih_t"] + h @ params["w_hh_t"] + params["b"]
        i = jax.nn.sigmoid(gates[:, 0 * H:1 * H])
        f = jax.nn.sigmoid(gates[:, 1 * H:2 * H])
        g = jnp.tanh(gates[:, 2 * H:3 * H])
        o = jax.nn.sigmoid(gates[:, 3 * H:4 * H])
        c = f * c + i * g
        h = o * jnp.tanh(c)
    h = jnp.maximum(h, 0.0)
    return h @ params["w_fc_t"] + params["b_fc"]


if __name__ == "__main__":
    B, T, D_IN, HIDDEN, OUT = 8, 8, 4, 32, 4

    key = jax.random.PRNGKey(0)
    k_x, k_p = jax.random.split(key)
    x = jax.random.normal(k_x, (B, T, D_IN), jnp.float32)
    params = init_params(k_p, D_IN, HIDDEN, OUT)

    ref = reference_forward(x, params)

    # Exact f32 mode: matches the PyTorch module numerics.
    out = jax.block_until_ready(lstm_model_forward(x, params, matmul_dtype=jnp.float32))
    assert out.shape == (B, OUT)
    assert jnp.allclose(out, ref, atol=1e-5, rtol=1e-5), "f32 mismatch vs reference"

    # bf16-MXU mode (perf-review path): bf16 matmul inputs, f32 accumulate/carries.
    out_bf16 = jax.block_until_ready(
        lstm_model_forward(x, params, matmul_dtype=jnp.bfloat16))
    assert jnp.allclose(out_bf16, ref, atol=5e-2, rtol=5e-2), "bf16 mismatch vs reference"

    print("KERNEL_OK")
</pallas_src>

<mosaic_0001>
module attributes {stable_mosaic.version = 11 : i64} {
  func.func @_lstm_kernel(%arg0: i32, %arg1: memref<64x4xf32, #tpu.memory_space<vmem>>, %arg2: memref<4x128xf32, #tpu.memory_space<vmem>>, %arg3: memref<32x128xf32, #tpu.memory_space<vmem>>, %arg4: memref<1x128xf32, #tpu.memory_space<vmem>>, %arg5: memref<32x4xf32, #tpu.memory_space<vmem>>, %arg6: memref<1x4xf32, #tpu.memory_space<vmem>>, %arg7: memref<8x4xf32, #tpu.memory_space<vmem>>) attributes {dimension_semantics = [#tpu.dimension_semantics<arbitrary>], iteration_bounds = array<i64: 1>, scalar_prefetch = 0 : i64, scratch_operands = 0 : i64, tpu.core_type = #tpu.core_type<tc>, window_params = [{pipeline_mode = #tpu.pipeline_mode<synchronous>, transform_indices = @transform_0, window_bounds = array<i64: 64, 4>}, {pipeline_mode = #tpu.pipeline_mode<synchronous>, transform_indices = @transform_1, window_bounds = array<i64: 4, 128>}, {pipeline_mode = #tpu.pipeline_mode<synchronous>, transform_indices = @transform_2, window_bounds = array<i64: 32, 128>}, {pipeline_mode = #tpu.pipeline_mode<synchronous>, transform_indices = @transform_3, window_bounds = array<i64: 1, 128>}, {pipeline_mode = #tpu.pipeline_mode<synchronous>, transform_indices = @transform_4, window_bounds = array<i64: 32, 4>}, {pipeline_mode = #tpu.pipeline_mode<synchronous>, transform_indices = @transform_5, window_bounds = array<i64: 1, 4>}, {pipeline_mode = #tpu.pipeline_mode<synchronous>, transform_indices = @transform_6, window_bounds = array<i64: 8, 4>}]} {
    %c0 = arith.constant 0 : index
    %c0_0 = arith.constant 0 : index
    %0 = vector.load %arg1[%c0, %c0_0] : memref<64x4xf32, #tpu.memory_space<vmem>>, vector<64x4xf32>
    %c0_1 = arith.constant 0 : index
    %c0_2 = arith.constant 0 : index
    %1 = vector.load %arg2[%c0_1, %c0_2] : memref<4x128xf32, #tpu.memory_space<vmem>>, vector<4x128xf32>
    %cst = arith.constant dense<0.000000e+00> : vector<64x128xf32>
    %2 = tpu.matmul %0, %1, %cst {dimension_numbers = #tpu.dot_dimension_numbers<[1], [0], [0], [1], [0, 0, 1, 1], [], []>} : vector<64x4xf32>, vector<4x128xf32>, vector<64x128xf32> -> vector<64x128xf32>
    %c0_3 = arith.constant 0 : index
    %c0_4 = arith.constant 0 : index
    %3 = vector.load %arg4[%c0_3, %c0_4] : memref<1x128xf32, #tpu.memory_space<vmem>>, vector<1x128xf32>
    %4 = vector.broadcast %3 : vector<1x128xf32> to vector<64x128xf32>
    %5 = arith.addf %2, %4 : vector<64x128xf32>
    %c0_5 = arith.constant 0 : index
    %c0_6 = arith.constant 0 : index
    %6 = vector.load %arg3[%c0_5, %c0_6] : memref<32x128xf32, #tpu.memory_space<vmem>>, vector<32x128xf32>
    %cst_7 = arith.constant 0.000000e+00 : f32
    %7 = vector.broadcast %cst_7 : f32 to vector<8x32xf32>
    %cst_8 = arith.constant 0.000000e+00 : f32
    %8 = vector.broadcast %cst_8 : f32 to vector<8x32xf32>
    %9 = vector.extract_strided_slice %5 {offsets = [0, 0], sizes = [8, 128], strides = [1, 1]} : vector<64x128xf32> to vector<8x128xf32>
    %cst_9 = arith.constant dense<0.000000e+00> : vector<8x128xf32>
    %10 = tpu.matmul %7, %6, %cst_9 {dimension_numbers = #tpu.dot_dimension_numbers<[1], [0], [0], [1], [0, 0, 1, 1], [], []>} : vector<8x32xf32>, vector<32x128xf32>, vector<8x128xf32> -> vector<8x128xf32>
    %11 = arith.addf %9, %10 : vector<8x128xf32>
    %12 = arith.negf %11 : vector<8x128xf32>
    %13 = math.exp %12 : vector<8x128xf32>
    %cst_10 = arith.constant 1.000000e+00 : f32
    %14 = vector.broadcast %cst_10 : f32 to vector<8x128xf32>
    %15 = arith.addf %14, %13 : vector<8x128xf32>
    %16 = arith.divf %14, %15 : vector<8x128xf32>
    %17 = math.tanh %11 : vector<8x128xf32>
    %18 = vector.extract_strided_slice %16 {offsets = [0, 0], sizes = [8, 32], strides = [1, 1]} : vector<8x128xf32> to vector<8x32xf32>
    %19 = vector.extract_strided_slice %16 {offsets = [0, 32], sizes = [8, 32], strides = [1, 1]} : vector<8x128xf32> to vector<8x32xf32>
    %20 = vector.extract_strided_slice %17 {offsets = [0, 64], sizes = [8, 32], strides = [1, 1]} : vector<8x128xf32> to vector<8x32xf32>
    %21 = vector.extract_strided_slice %16 {offsets = [0, 96], sizes = [8, 32], strides = [1, 1]} : vector<8x128xf32> to vector<8x32xf32>
    %22 = arith.mulf %19, %8 : vector<8x32xf32>
    %23 = arith.mulf %18, %20 : vector<8x32xf32>
    %24 = arith.addf %22, %23 : vector<8x32xf32>
    %25 = math.tanh %24 : vector<8x32xf32>
    %26 = arith.mulf %21, %25 : vector<8x32xf32>
    %27 = vector.extract_strided_slice %5 {offsets = [8, 0], sizes = [8, 128], strides = [1, 1]} : vector<64x128xf32> to vector<8x128xf32>
    %cst_11 = arith.constant dense<0.000000e+00> : vector<8x128xf32>
    %28 = tpu.matmul %26, %6, %cst_11 {dimension_numbers = #tpu.dot_dimension_numbers<[1], [0], [0], [1], [0, 0, 1, 1], [], []>} : vector<8x32xf32>, vector<32x128xf32>, vector<8x128xf32> -> vector<8x128xf32>
    %29 = arith.addf %27, %28 : vector<8x128xf32>
    %30 = arith.negf %29 : vector<8x128xf32>
    %31 = math.exp %30 : vector<8x128xf32>
    %cst_12 = arith.constant 1.000000e+00 : f32
    %32 = vector.broadcast %cst_12 : f32 to vector<8x128xf32>
    %33 = arith.addf %32, %31 : vector<8x128xf32>
    %34 = arith.divf %32, %33 : vector<8x128xf32>
    %35 = math.tanh %29 : vector<8x128xf32>
    %36 = vector.extract_strided_slice %34 {offsets = [0, 0], sizes = [8, 32], strides = [1, 1]} : vector<8x128xf32> to vector<8x32xf32>
    %37 = vector.extract_strided_slice %34 {offsets = [0, 32], sizes = [8, 32], strides = [1, 1]} : vector<8x128xf32> to vector<8x32xf32>
    %38 = vector.extract_strided_slice %35 {offsets = [0, 64], sizes = [8, 32], strides = [1, 1]} : vector<8x128xf32> to vector<8x32xf32>
    %39 = vector.extract_strided_slice %34 {offsets = [0, 96], sizes = [8, 32], strides = [1, 1]} : vector<8x128xf32> to vector<8x32xf32>
    %40 = arith.mulf %37, %24 : vector<8x32xf32>
    %41 = arith.mulf %36, %38 : vector<8x32xf32>
    %42 = arith.addf %40, %41 : vector<8x32xf32>
    %43 = math.tanh %42 : vector<8x32xf32>
    %44 = arith.mulf %39, %43 : vector<8x32xf32>
    %45 = vector.extract_strided_slice %5 {offsets = [16, 0], sizes = [8, 128], strides = [1, 1]} : vector<64x128xf32> to vector<8x128xf32>
    %cst_13 = arith.constant dense<0.000000e+00> : vector<8x128xf32>
    %46 = tpu.matmul %44, %6, %cst_13 {dimension_numbers = #tpu.dot_dimension_numbers<[1], [0], [0], [1], [0, 0, 1, 1], [], []>} : vector<8x32xf32>, vector<32x128xf32>, vector<8x128xf32> -> vector<8x128xf32>
    %47 = arith.addf %45, %46 : vector<8x128xf32>
    %48 = arith.negf %47 : vector<8x128xf32>
    %49 = math.exp %48 : vector<8x128xf32>
    %cst_14 = arith.constant 1.000000e+00 : f32
    %50 = vector.broadcast %cst_14 : f32 to vector<8x128xf32>
    %51 = arith.addf %50, %49 : vector<8x128xf32>
    %52 = arith.divf %50, %51 : vector<8x128xf32>
    %53 = math.tanh %47 : vector<8x128xf32>
    %54 = vector.extract_strided_slice %52 {offsets = [0, 0], sizes = [8, 32], strides = [1, 1]} : vector<8x128xf32> to vector<8x32xf32>
    %55 = vector.extract_strided_slice %52 {offsets = [0, 32], sizes = [8, 32], strides = [1, 1]} : vector<8x128xf32> to vector<8x32xf32>
    %56 = vector.extract_strided_slice %53 {offsets = [0, 64], sizes = [8, 32], strides = [1, 1]} : vector<8x128xf32> to vector<8x32xf32>
    %57 = vector.extract_strided_slice %52 {offsets = [0, 96], sizes = [8, 32], strides = [1, 1]} : vector<8x128xf32> to vector<8x32xf32>
    %58 = arith.mulf %55, %42 : vector<8x32xf32>
    %59 = arith.mulf %54, %56 : vector<8x32xf32>
    %60 = arith.addf %58, %59 : vector<8x32xf32>
    %61 = math.tanh %60 : vector<8x32xf32>
    %62 = arith.mulf %57, %61 : vector<8x32xf32>
    %63 = vector.extract_strided_slice %5 {offsets = [24, 0], sizes = [8, 128], strides = [1, 1]} : vector<64x128xf32> to vector<8x128xf32>
    %cst_15 = arith.constant dense<0.000000e+00> : vector<8x128xf32>
    %64 = tpu.matmul %62, %6, %cst_15 {dimension_numbers = #tpu.dot_dimension_numbers<[1], [0], [0], [1], [0, 0, 1, 1], [], []>} : vector<8x32xf32>, vector<32x128xf32>, vector<8x128xf32> -> vector<8x128xf32>
    %65 = arith.addf %63, %64 : vector<8x128xf32>
    %66 = arith.negf %65 : vector<8x128xf32>
    %67 = math.exp %66 : vector<8x128xf32>
    %cst_16 = arith.constant 1.000000e+00 : f32
    %68 = vector.broadcast %cst_16 : f32 to vector<8x128xf32>
    %69 = arith.addf %68, %67 : vector<8x128xf32>
    %70 = arith.divf %68, %69 : vector<8x128xf32>
    %71 = math.tanh %65 : vector<8x128xf32>
    %72 = vector.extract_strided_slice %70 {offsets = [0, 0], sizes = [8, 32], strides = [1, 1]} : vector<8x128xf32> to vector<8x32xf32>
    %73 = vector.extract_strided_slice %70 {offsets = [0, 32], sizes = [8, 32], strides = [1, 1]} : vector<8x128xf32> to vector<8x32xf32>
    %74 = vector.extract_strided_slice %71 {offsets = [0, 64], sizes = [8, 32], strides = [1, 1]} : vector<8x128xf32> to vector<8x32xf32>
    %75 = vector.extract_strided_slice %70 {offsets = [0, 96], sizes = [8, 32], strides = [1, 1]} : vector<8x128xf32> to vector<8x32xf32>
    %76 = arith.mulf %73, %60 : vector<8x32xf32>
    %77 = arith.mulf %72, %74 : vector<8x32xf32>
    %78 = arith.addf %76, %77 : vector<8x32xf32>
    %79 = math.tanh %78 : vector<8x32xf32>
    %80 = arith.mulf %75, %79 : vector<8x32xf32>
    %81 = vector.extract_strided_slice %5 {offsets = [32, 0], sizes = [8, 128], strides = [1, 1]} : vector<64x128xf32> to vector<8x128xf32>
    %cst_17 = arith.constant dense<0.000000e+00> : vector<8x128xf32>
    %82 = tpu.matmul %80, %6, %cst_17 {dimension_numbers = #tpu.dot_dimension_numbers<[1], [0], [0], [1], [0, 0, 1, 1], [], []>} : vector<8x32xf32>, vector<32x128xf32>, vector<8x128xf32> -> vector<8x128xf32>
    %83 = arith.addf %81, %82 : vector<8x128xf32>
    %84 = arith.negf %83 : vector<8x128xf32>
    %85 = math.exp %84 : vector<8x128xf32>
    %cst_18 = arith.constant 1.000000e+00 : f32
    %86 = vector.broadcast %cst_18 : f32 to vector<8x128xf32>
    %87 = arith.addf %86, %85 : vector<8x128xf32>
    %88 = arith.divf %86, %87 : vector<8x128xf32>
    %89 = math.tanh %83 : vector<8x128xf32>
    %90 = vector.extract_strided_slice %88 {offsets = [0, 0], sizes = [8, 32], strides = [1, 1]} : vector<8x128xf32> to vector<8x32xf32>
    %91 = vector.extract_strided_slice %88 {offsets = [0, 32], sizes = [8, 32], strides = [1, 1]} : vector<8x128xf32> to vector<8x32xf32>
    %92 = vector.extract_strided_slice %89 {offsets = [0, 64], sizes = [8, 32], strides = [1, 1]} : vector<8x128xf32> to vector<8x32xf32>
    %93 = vector.extract_strided_slice %88 {offsets = [0, 96], sizes = [8, 32], strides = [1, 1]} : vector<8x128xf32> to vector<8x32xf32>
    %94 = arith.mulf %91, %78 : vector<8x32xf32>
    %95 = arith.mulf %90, %92 : vector<8x32xf32>
    %96 = arith.addf %94, %95 : vector<8x32xf32>
    %97 = math.tanh %96 : vector<8x32xf32>
    %98 = arith.mulf %93, %97 : vector<8x32xf32>
    %99 = vector.extract_strided_slice %5 {offsets = [40, 0], sizes = [8, 128], strides = [1, 1]} : vector<64x128xf32> to vector<8x128xf32>
    %cst_19 = arith.constant dense<0.000000e+00> : vector<8x128xf32>
    %100 = tpu.matmul %98, %6, %cst_19 {dimension_numbers = #tpu.dot_dimension_numbers<[1], [0], [0], [1], [0, 0, 1, 1], [], []>} : vector<8x32xf32>, vector<32x128xf32>, vector<8x128xf32> -> vector<8x128xf32>
    %101 = arith.addf %99, %100 : vector<8x128xf32>
    %102 = arith.negf %101 : vector<8x128xf32>
    %103 = math.exp %102 : vector<8x128xf32>
    %cst_20 = arith.constant 1.000000e+00 : f32
    %104 = vector.broadcast %cst_20 : f32 to vector<8x128xf32>
    %105 = arith.addf %104, %103 : vector<8x128xf32>
    %106 = arith.divf %104, %105 : vector<8x128xf32>
    %107 = math.tanh %101 : vector<8x128xf32>
    %108 = vector.extract_strided_slice %106 {offsets = [0, 0], sizes = [8, 32], strides = [1, 1]} : vector<8x128xf32> to vector<8x32xf32>
    %109 = vector.extract_strided_slice %106 {offsets = [0, 32], sizes = [8, 32], strides = [1, 1]} : vector<8x128xf32> to vector<8x32xf32>
    %110 = vector.extract_strided_slice %107 {offsets = [0, 64], sizes = [8, 32], strides = [1, 1]} : vector<8x128xf32> to vector<8x32xf32>
    %111 = vector.extract_strided_slice %106 {offsets = [0, 96], sizes = [8, 32], strides = [1, 1]} : vector<8x128xf32> to vector<8x32xf32>
    %112 = arith.mulf %109, %96 : vector<8x32xf32>
    %113 = arith.mulf %108, %110 : vector<8x32xf32>
    %114 = arith.addf %112, %113 : vector<8x32xf32>
    %115 = math.tanh %114 : vector<8x32xf32>
    %116 = arith.mulf %111, %115 : vector<8x32xf32>
    %117 = vector.extract_strided_slice %5 {offsets = [48, 0], sizes = [8, 128], strides = [1, 1]} : vector<64x128xf32> to vector<8x128xf32>
    %cst_21 = arith.constant dense<0.000000e+00> : vector<8x128xf32>
    %118 = tpu.matmul %116, %6, %cst_21 {dimension_numbers = #tpu.dot_dimension_numbers<[1], [0], [0], [1], [0, 0, 1, 1], [], []>} : vector<8x32xf32>, vector<32x128xf32>, vector<8x128xf32> -> vector<8x128xf32>
    %119 = arith.addf %117, %118 : vector<8x128xf32>
    %120 = arith.negf %119 : vector<8x128xf32>
    %121 = math.exp %120 : vector<8x128xf32>
    %cst_22 = arith.constant 1.000000e+00 : f32
    %122 = vector.broadcast %cst_22 : f32 to vector<8x128xf32>
    %123 = arith.addf %122, %121 : vector<8x128xf32>
    %124 = arith.divf %122, %123 : vector<8x128xf32>
    %125 = math.tanh %119 : vector<8x128xf32>
    %126 = vector.extract_strided_slice %124 {offsets = [0, 0], sizes = [8, 32], strides = [1, 1]} : vector<8x128xf32> to vector<8x32xf32>
    %127 = vector.extract_strided_slice %124 {offsets = [0, 32], sizes = [8, 32], strides = [1, 1]} : vector<8x128xf32> to vector<8x32xf32>
    %128 = vector.extract_strided_slice %125 {offsets = [0, 64], sizes = [8, 32], strides = [1, 1]} : vector<8x128xf32> to vector<8x32xf32>
    %129 = vector.extract_strided_slice %124 {offsets = [0, 96], sizes = [8, 32], strides = [1, 1]} : vector<8x128xf32> to vector<8x32xf32>
    %130 = arith.mulf %127, %114 : vector<8x32xf32>
    %131 = arith.mulf %126, %128 : vector<8x32xf32>
    %132 = arith.addf %130, %131 : vector<8x32xf32>
    %133 = math.tanh %132 : vector<8x32xf32>
    %134 = arith.mulf %129, %133 : vector<8x32xf32>
    %135 = vector.extract_strided_slice %5 {offsets = [56, 0], sizes = [8, 128], strides = [1, 1]} : vector<64x128xf32> to vector<8x128xf32>
    %cst_23 = arith.constant dense<0.000000e+00> : vector<8x128xf32>
    %136 = tpu.matmul %134, %6, %cst_23 {dimension_numbers = #tpu.dot_dimension_numbers<[1], [0], [0], [1], [0, 0, 1, 1], [], []>} : vector<8x32xf32>, vector<32x128xf32>, vector<8x128xf32> -> vector<8x128xf32>
    %137 = arith.addf %135, %136 : vector<8x128xf32>
    %138 = arith.negf %137 : vector<8x128xf32>
    %139 = math.exp %138 : vector<8x128xf32>
    %cst_24 = arith.constant 1.000000e+00 : f32
    %140 = vector.broadcast %cst_24 : f32 to vector<8x128xf32>
    %141 = arith.addf %140, %139 : vector<8x128xf32>
    %142 = arith.divf %140, %141 : vector<8x128xf32>
    %143 = math.tanh %137 : vector<8x128xf32>
    %144 = vector.extract_strided_slice %142 {offsets = [0, 0], sizes = [8, 32], strides = [1, 1]} : vector<8x128xf32> to vector<8x32xf32>
    %145 = vector.extract_strided_slice %142 {offsets = [0, 32], sizes = [8, 32], strides = [1, 1]} : vector<8x128xf32> to vector<8x32xf32>
    %146 = vector.extract_strided_slice %143 {offsets = [0, 64], sizes = [8, 32], strides = [1, 1]} : vector<8x128xf32> to vector<8x32xf32>
    %147 = vector.extract_strided_slice %142 {offsets = [0, 96], sizes = [8, 32], strides = [1, 1]} : vector<8x128xf32> to vector<8x32xf32>
    %148 = arith.mulf %145, %132 : vector<8x32xf32>
    %149 = arith.mulf %144, %146 : vector<8x32xf32>
    %150 = arith.addf %148, %149 : vector<8x32xf32>
    %151 = math.tanh %150 : vector<8x32xf32>
    %152 = arith.mulf %147, %151 : vector<8x32xf32>
    %cst_25 = arith.constant 0.000000e+00 : f32
    %153 = vector.broadcast %cst_25 : f32 to vector<8x32xf32>
    %154 = arith.maximumf %152, %153 : vector<8x32xf32>
    %c0_26 = arith.constant 0 : index
    %c0_27 = arith.constant 0 : index
    %155 = vector.load %arg5[%c0_26, %c0_27] : memref<32x4xf32, #tpu.memory_space<vmem>>, vector<32x4xf32>
    %cst_28 = arith.constant dense<0.000000e+00> : vector<8x4xf32>
    %156 = tpu.matmul %154, %155, %cst_28 {dimension_numbers = #tpu.dot_dimension_numbers<[1], [0], [0], [1], [0, 0, 1, 1], [], []>} : vector<8x32xf32>, vector<32x4xf32>, vector<8x4xf32> -> vector<8x4xf32>
    %c0_29 = arith.constant 0 : index
    %c0_30 = arith.constant 0 : index
    %157 = vector.load %arg6[%c0_29, %c0_30] : memref<1x4xf32, #tpu.memory_space<vmem>>, vector<1x4xf32>
    %158 = vector.broadcast %157 : vector<1x4xf32> to vector<8x4xf32>
    %159 = arith.addf %156, %158 : vector<8x4xf32>
    %c0_31 = arith.constant 0 : index
    %c0_32 = arith.constant 0 : index
    %160 = vector.load %arg7[%c0_31, %c0_32] : memref<8x4xf32, #tpu.memory_space<vmem>>, vector<8x4xf32>
    tpu.vector_store %arg7[%c0_31, %c0_32], %159 {strides = array<i32>} : memref<8x4xf32, #tpu.memory_space<vmem>>, vector<8x4xf32>,
    return
  }
  func.func @transform_0(%arg0: i32) -> (i32, i32) {
    %c0_i32 = arith.constant 0 : i32
    %c0_i32_0 = arith.constant 0 : i32
    %c0_i32_1 = arith.constant 0 : i32
    return %c0_i32, %c0_i32_0 : i32, i32
  }
  func.func @transform_1(%arg0: i32) -> (i32, i32) {
    %c0_i32 = arith.constant 0 : i32
    %c0_i32_0 = arith.constant 0 : i32
    %c0_i32_1 = arith.constant 0 : i32
    return %c0_i32, %c0_i32_0 : i32, i32
  }
  func.func @transform_2(%arg0: i32) -> (i32, i32) {
    %c0_i32 = arith.constant 0 : i32
    %c0_i32_0 = arith.constant 0 : i32
    %c0_i32_1 = arith.constant 0 : i32
    return %c0_i32, %c0_i32_0 : i32, i32
  }
  func.func @transform_3(%arg0: i32) -> (i32, i32) {
    %c0_i32 = arith.constant 0 : i32
    %c0_i32_0 = arith.constant 0 : i32
    %c0_i32_1 = arith.constant 0 : i32
    return %c0_i32, %c0_i32_0 : i32, i32
  }
  func.func @transform_4(%arg0: i32) -> (i32, i32) {
    %c0_i32 = arith.constant 0 : i32
    %c0_i32_0 = arith.constant 0 : i32
    %c0_i32_1 = arith.constant 0 : i32
    return %c0_i32, %c0_i32_0 : i32, i32
  }
  func.func @transform_5(%arg0: i32) -> (i32, i32) {
    %c0_i32 = arith.constant 0 : i32
    %c0_i32_0 = arith.constant 0 : i32
    %c0_i32_1 = arith.constant 0 : i32
    return %c0_i32, %c0_i32_0 : i32, i32
  }
  func.func @transform_6(%arg0: i32) -> (i32, i32) {
    %c0_i32 = arith.constant 0 : i32
    %c0_i32_0 = arith.constant 0 : i32
    %c0_i32_1 = arith.constant 0 : i32
    return %c0_i32, %c0_i32_0 : i32, i32
  }
}

</mosaic_0001>

<llo_original>
// kernel: tpu_custom_call.1
$region0: #{tpu_custom_call.1}
  #allocation0 [shape = 'u32[]', space=smem, size = 0x4, offset = 0x4, fixed_abs, tag = 'smem constant byte address 0x4 - core index']
  #allocation1 [shape = 'u32[144,128]{1,0:T(1,128)}', space=vmem, size = 0x12000, scoped, tag = 'internal scratch']
  %s0 = inlined_call_operand.vmem [shape: f32[64,4], index: 0, kind: input, shape index: {}]
  %s1 = inlined_call_operand.vmem [shape: f32[4,128], index: 1, kind: input, shape index: {}]
  %s2 = inlined_call_operand.vmem [shape: f32[32,128], index: 2, kind: input, shape index: {}]
  %s3 = inlined_call_operand.vmem [shape: f32[1,128], index: 3, kind: input, shape index: {}]
  %s4 = inlined_call_operand.vmem [shape: f32[32,4], index: 4, kind: input, shape index: {}]
  %s5 = inlined_call_operand.vmem [shape: f32[1,4], index: 5, kind: input, shape index: {}]
  %s6 = inlined_call_operand.vmem [shape: f32[8,4], index: 6, kind: output, shape index: {}]
  %s7 = sld [smem:[#allocation0]]
  $region34: #{tpu_custom_call.1} parent=0
    _
  %s9 = ssub.s32 1, %s7
  %s10 = scalar_select 0, %s9, %s7
  // Predicated region
  $region2: #{tpu_custom_call.1} parent=0 // pred_check
    _
  $region3: #{tpu_custom_call.1} parent=0 // pred_check_branch
    %12 = sbr.rel (0) target = $region5
  $region4: #{tpu_custom_call.1} parent=0 // pred_region
    _
  $region5: #{tpu_custom_call.1} parent=0 // pred_fallthru
    _
  // Predicated region
  $region6: #{tpu_custom_call.1} parent=0 // pred_check
    _
  $region7: #{tpu_custom_call.1} parent=0 // pred_check_branch
    %14 = sbr.rel (0) target = $region9
  $region8: #{tpu_custom_call.1} parent=0 // pred_region
    _
  $region9: #{tpu_custom_call.1} parent=0 // pred_fallthru
    _
  // Predicated region
  $region10: #{tpu_custom_call.1} parent=0 // pred_check
    _
  $region11: #{tpu_custom_call.1} parent=0 // pred_check_branch
    %16 = sbr.rel (0) target = $region13
  $region12: #{tpu_custom_call.1} parent=0 // pred_region
    _
  $region13: #{tpu_custom_call.1} parent=0 // pred_fallthru
    _
  // Predicated region
  $region14: #{tpu_custom_call.1} parent=0 // pred_check
    _
  $region15: #{tpu_custom_call.1} parent=0 // pred_check_branch
    %18 = sbr.rel (0) target = $region17
  $region16: #{tpu_custom_call.1} parent=0 // pred_region
    _
  $region17: #{tpu_custom_call.1} parent=0 // pred_fallthru
    _
  // Predicated region
  $region18: #{tpu_custom_call.1} parent=0 // pred_check
    _
  $region19: #{tpu_custom_call.1} parent=0 // pred_check_branch
    %20 = sbr.rel (0) target = $region21
  $region20: #{tpu_custom_call.1} parent=0 // pred_region
    _
  $region21: #{tpu_custom_call.1} parent=0 // pred_fallthru
    _
  // Predicated region
  $region22: #{tpu_custom_call.1} parent=0 // pred_check
    _
  $region23: #{tpu_custom_call.1} parent=0 // pred_check_branch
    %22 = sbr.rel (0) target = $region25
  $region24: #{tpu_custom_call.1} parent=0 // pred_region
    _
  $region25: #{tpu_custom_call.1} parent=0 // pred_fallthru
    _
  %v23 = vld [vmem:[%s0] sm:$0xff]
  %v24 = vld [vmem:[%s0 + $0x8] sm:$0xff]
  %v25 = vld [vmem:[%s0 + $0x10] sm:$0xff]
  %v26 = vld [vmem:[%s0 + $0x18] sm:$0xff]
  %v27 = vld [vmem:[%s0 + $0x20] sm:$0xff]
  %v28 = vld [vmem:[%s0 + $0x28] sm:$0xff]
  %v29 = vld [vmem:[%s0 + $0x30] sm:$0xff]
  %v30 = vld [vmem:[%s0 + $0x38] sm:$0xff]
  %v31 = vld [vmem:[%s1] sm:$0xf]
  %v32 = vld [vmem:[%s3] sm:$0x1]
  %v34 = vlaneseq
  %v35 = vshrl.u32 %v34, 7
  %v36 = vsub.s32 0, %v35
  %v37 = vrot.slane %v32, %v36
  %vm39 = vcmask 31744
  %v41 = vsel %vm39, %v23, 0
  %v44 = vsel %vm39, %v24, 0
  %v47 = vsel %vm39, %v25, 0
  %v50 = vsel %vm39, %v26, 0
  %v53 = vsel %vm39, %v27, 0
  %v56 = vsel %vm39, %v28, 0
  %v59 = vsel %vm39, %v29, 0
  %v62 = vsel %vm39, %v30, 0
  %vm64 = vcmask 1043456
  %v66 = vsel %vm64, %v31, 0
  %68 = vmatprep.subr.mxu0 0.0
  %69 = vmatpush1.msra.mxu0 %v66
  %70 = vmatprep.subr.mxu0 0.0
  %71 = vmatpush1.msra.mxu0 0.0
  %72 = vmatprep.subr.mxu0 0.0
  %73 = vmatpush1.msra.mxu0 0.0
  %74 = vmatprep.subr.mxu0 0.0
  %75 = vmatpush1.msra.mxu0 0.0
  %76 = vmatprep.subr.mxu0 0.0
  %77 = vmatpush1.msra.mxu0 0.0
  %78 = vmatprep.subr.mxu0 0.0
  %79 = vmatpush1.msra.mxu0 0.0
  %80 = vmatprep.subr.mxu0 0.0
  %81 = vmatpush1.msra.mxu0 0.0
  %82 = vmatprep.subr.mxu0 0.0
  %83 = vmatpush1.msra.mxu0 0.0
  %84 = vmatprep.subr.mxu0 0.0
  %85 = vmatpush1.msra.mxu0 0.0
  %86 = vmatprep.subr.mxu0 0.0
  %87 = vmatpush1.msra.mxu0 0.0
  %88 = vmatprep.subr.mxu0 0.0
  %89 = vmatpush1.msra.mxu0 0.0
  %90 = vmatprep.subr.mxu0 0.0
  %91 = vmatpush1.msra.mxu0 0.0
  %92 = vmatprep.subr.mxu0 0.0
  %93 = vmatpush1.msra.mxu0 0.0
  %94 = vmatprep.subr.mxu0 0.0
  %95 = vmatpush1.msra.mxu0 0.0
  %96 = vmatprep.subr.mxu0 0.0
  %97 = vmatpush1.msra.mxu0 0.0
  %98 = vmatprep.subr.mxu0 0.0
  %99 = vmatpush1.msra.mxu0 0.0
  %100 = vmatprep.subr.mxu0 0.0
  %101 = vmatpush1.msra.mxu0 0.0
  %102 = vmatprep.subr.mxu0 0.0
  %103 = vmatpush1.msra.mxu0 0.0
  %104 = vmatprep.subr.mxu0 0.0
  %105 = vmatpush1.msra.mxu0 0.0
  %106 = vmatprep.subr.mxu0 0.0
  %107 = vmatpush1.msra.mxu0 0.0
  %108 = vmatprep.subr.mxu0 0.0
  %109 = vmatpush1.msra.mxu0 0.0
  %110 = vmatprep.subr.mxu0 0.0
  %111 = vmatpush1.msra.mxu0 0.0
  %112 = vmatprep.subr.mxu0 0.0
  %113 = vmatpush1.msra.mxu0 0.0
  %114 = vmatprep.subr.mxu0 0.0
  %115 = vmatpush1.msra.mxu0 0.0
  %116 = vmatprep.subr.mxu0 0.0
  %117 = vmatpush1.msra.mxu0 0.0
  %118 = vmatprep.subr.mxu0 0.0
  %119 = vmatpush1.msra.mxu0 0.0
  %120 = vmatprep.subr.mxu0 0.0
  %121 = vmatpush1.msra.mxu0 0.0
  %122 = vmatprep.subr.mxu0 0.0
  %123 = vmatpush1.msra.mxu0 0.0
  %124 = vmatprep.subr.mxu0 0.0
  %125 = vmatpush1.msra.mxu0 0.0
  %126 = vmatprep.subr.mxu0 0.0
  %127 = vmatpush1.msra.mxu0 0.0
  %128 = vmatprep.subr.mxu0 0.0
  %129 = vmatpush1.msra.mxu0 0.0
  %130 = vmatprep.subr.mxu0 0.0
  %131 = vmatpush1.msra.mxu0 0.0
  %132 = vmatprep.mubr.f32.mxu0 0.0
  %133 = vmatmul.mubr.f32.gmra.mrb[0].mxu0 %v41
  %v134 = vpop.f32.mrb[0].mxu0
  %v135 = vadd.f32 %v37, %v134
  %v136 = vpop.f32.mrb[0].mxu0
  %137 = vmatprep.mubr.f32.mxu0 0.0
  %138 = vmatmul.mubr.f32.gmra.mrb[0].mxu0 %v44
  %v139 = vpop.f32.mrb[0].mxu0
  %v140 = vadd.f32 %v37, %v139
  %v141 = vpop.f32.mrb[0].mxu0
  %142 = vmatprep.mubr.f32.mxu0 0.0
  %143 = vmatmul.mubr.f32.gmra.mrb[0].mxu0 %v47
  %v144 = vpop.f32.mrb[0].mxu0
  %v145 = vadd.f32 %v37, %v144
  %v146 = vpop.f32.mrb[0].mxu0
  %147 = vmatprep.mubr.f32.mxu0 0.0
  %148 = vmatmul.mubr.f32.gmra.mrb[0].mxu0 %v50
  %v149 = vpop.f32.mrb[0].mxu0
  %v150 = vadd.f32 %v37, %v149
  %v151 = vpop.f32.mrb[0].mxu0
  %152 = vmatprep.mubr.f32.mxu0 0.0
  %153 = vmatmul.mubr.f32.gmra.mrb[0].mxu0 %v53
  %v154 = vpop.f32.mrb[0].mxu0
  %v155 = vadd.f32 %v37, %v154
  %v156 = vpop.f32.mrb[0].mxu0
  %157 = vmatprep.mubr.f32.mxu0 0.0
  %158 = vmatmul.mubr.f32.gmra.mrb[0].mxu0 %v56
  %v159 = vpop.f32.mrb[0].mxu0
  %v160 = vadd.f32 %v37, %v159
  %v161 = vpop.f32.mrb[0].mxu0
  %162 = vmatprep.mubr.f32.mxu0 0.0
  %163 = vmatmul.mubr.f32.gmra.mrb[0].mxu0 %v59
  %v164 = vpop.f32.mrb[0].mxu0
  %v165 = vadd.f32 %v37, %v164
  %v166 = vpop.f32.mrb[0].mxu0
  %167 = vmatprep.mubr.f32.mxu0 0.0
  %168 = vmatmul.mubr.f32.gmra.mrb[0].mxu0 %v62
  %v169 = vpop.f32.mrb[0].mxu0
  %v170 = vadd.f32 %v37, %v169
  %v171 = vpop.f32.mrb[0].mxu0
  %172 = vdwg.mxu0
  %v173 = vld [vmem:[%s2] sm:$0xff]
  %v174 = vld [vmem:[%s2 + $0x8] sm:$0xff]
  %v175 = vld [vmem:[%s2 + $0x10] sm:$0xff]
  %v176 = vld [vmem:[%s2 + $0x18] sm:$0xff]
  %vm177 = vcmask 261120
  %v179 = vsel %vm177, 0.0, 0
  %181 = vmatprep.subr.mxu0 0.0
  %182 = vmatpush1.msra.mxu0 %v173
  %183 = vmatprep.subr.mxu0 0.0
  %184 = vmatpush1.msra.mxu0 %v174
  %185 = vmatprep.subr.mxu0 0.0
  %186 = vmatpush1.msra.mxu0 %v175
  %187 = vmatprep.subr.mxu0 0.0
  %188 = vmatpush1.msra.mxu0 %v176
  %189 = vmatprep.subr.mxu0 0.0
  %190 = vmatpush1.msra.mxu0 0.0
  %191 = vmatprep.subr.mxu0 0.0
  %192 = vmatpush1.msra.mxu0 0.0
  %193 = vmatprep.subr.mxu0 0.0
  %194 = vmatpush1.msra.mxu0 0.0
  %195 = vmatprep.subr.mxu0 0.0
  %196 = vmatpush1.msra.mxu0 0.0
  %197 = vmatprep.subr.mxu0 0.0
  %198 = vmatpush1.msra.mxu0 0.0
  %199 = vmatprep.subr.mxu0 0.0
  %200 = vmatpush1.msra.mxu0 0.0
  %201 = vmatprep.subr.mxu0 0.0
  %202 = vmatpush1.msra.mxu0 0.0
  %203 = vmatprep.subr.mxu0 0.0
  %204 = vmatpush1.msra.mxu0 0.0
  %205 = vmatprep.subr.mxu0 0.0
  %206 = vmatpush1.msra.mxu0 0.0
  %207 = vmatprep.subr.mxu0 0.0
  %208 = vmatpush1.msra.mxu0 0.0
  %209 = vmatprep.subr.mxu0 0.0
  %210 = vmatpush1.msra.mxu0 0.0
  %211 = vmatprep.subr.mxu0 0.0
  %212 = vmatpush1.msra.mxu0 0.0
  %213 = vmatprep.subr.mxu0 0.0
  %214 = vmatpush1.msra.mxu0 0.0
  %215 = vmatprep.subr.mxu0 0.0
  %216 = vmatpush1.msra.mxu0 0.0
  %217 = vmatprep.subr.mxu0 0.0
  %218 = vmatpush1.msra.mxu0 0.0
  %219 = vmatprep.subr.mxu0 0.0
  %220 = vmatpush1.msra.mxu0 0.0
  %221 = vmatprep.subr.mxu0 0.0
  %222 = vmatpush1.msra.mxu0 0.0
  %223 = vmatprep.subr.mxu0 0.0
  %224 = vmatpush1.msra.mxu0 0.0
  %225 = vmatprep.subr.mxu0 0.0
  %226 = vmatpush1.msra.mxu0 0.0
  %227 = vmatprep.subr.mxu0 0.0
  %228 = vmatpush1.msra.mxu0 0.0
  %229 = vmatprep.subr.mxu0 0.0
  %230 = vmatpush1.msra.mxu0 0.0
  %231 = vmatprep.subr.mxu0 0.0
  %232 = vmatpush1.msra.mxu0 0.0
  %233 = vmatprep.subr.mxu0 0.0
  %234 = vmatpush1.msra.mxu0 0.0
  %235 = vmatprep.subr.mxu0 0.0
  %236 = vmatpush1.msra.mxu0 0.0
  %237 = vmatprep.subr.mxu0 0.0
  %238 = vmatpush1.msra.mxu0 0.0
  %239 = vmatprep.subr.mxu0 0.0
  %240 = vmatpush1.msra.mxu0 0.0
  %241 = vmatprep.subr.mxu0 0.0
  %242 = vmatpush1.msra.mxu0 0.0
  %243 = vmatprep.subr.mxu0 0.0
  %244 = vmatpush1.msra.mxu0 0.0
  %245 = vmatprep.mubr.f32.mxu0 0.0
  %246 = vmatmul.mubr.f32.gmra.mrb[0].mxu0 %v179
  %v247 = vpop.f32.mrb[0].mxu0
  %v248 = vadd.f32 0.0, %v247
  %v249 = vpop.f32.mrb[0].mxu0
  %250 = vdwg.mxu0
  %v251 = vadd.f32 %v135, %v248
  %v252 = vxor.u32 %v251, 2147483648
  %v253 = vmul.f32 %v252, 1.442695
  %v254 = vpow.pop %v253
  %v255 = vadd.f32 %v254, 1.0
  %v256 = vrcp.pop %v255
  %v257 = vmul.f32 1.0, %v256
  %v258 = vtanh.pop %v251
  %v259 = vmul.f32 %v257, 0.0
  %261 = vrot.lane.b32.xlu0 %v258, 64
  %v262 = vpop.permute.xlu0 %261
  %v264 = vmul.f32 %v257, %v262
  %266 = vrot.lane.b32.xlu0 %v264, 32
  %v267 = vpop.permute.xlu0 %266
  %v269 = vadd.f32 %v259, %v267
  %v270 = vtanh.pop %v269
  %272 = vrot.lane.b32.xlu0 %v270, 64
  %v273 = vpop.permute.xlu0 %272
  %v275 = vmul.f32 %v257, %v273
  %277 = vrot.lane.b32.xlu0 %v275, 32
  %v278 = vpop.permute.xlu0 %277
  %v279 = vsel %vm177, %v278, 0
  %281 = vmatprep.subr.mxu0 0.0
  %282 = vmatpush1.msra.mxu0 %v173
  %283 = vmatprep.subr.mxu0 0.0
  %284 = vmatpush1.msra.mxu0 %v174
  %285 = vmatprep.subr.mxu0 0.0
  %286 = vmatpush1.msra.mxu0 %v175
  %287 = vmatprep.subr.mxu0 0.0
  %288 = vmatpush1.msra.mxu0 %v176
  %289 = vmatprep.subr.mxu0 0.0
  %290 = vmatpush1.msra.mxu0 0.0
  %291 = vmatprep.subr.mxu0 0.0
  %292 = vmatpush1.msra.mxu0 0.0
  %293 = vmatprep.subr.mxu0 0.0
  %294 = vmatpush1.msra.mxu0 0.0
  %295 = vmatprep.subr.mxu0 0.0
  %296 = vmatpush1.msra.mxu0 0.0
  %297 = vmatprep.subr.mxu0 0.0
  %298 = vmatpush1.msra.mxu0 0.0
  %299 = vmatprep.subr.mxu0 0.0
  %300 = vmatpush1.msra.mxu0 0.0
  %301 = vmatprep.subr.mxu0 0.0
  %302 = vmatpush1.msra.mxu0 0.0
  %303 = vmatprep.subr.mxu0 0.0
  %304 = vmatpush1.msra.mxu0 0.0
  %305 = vmatprep.subr.mxu0 0.0
  %306 = vmatpush1.msra.mxu0 0.0
  %307 = vmatprep.subr.mxu0 0.0
  %308 = vmatpush1.msra.mxu0 0.0
  %309 = vmatprep.subr.mxu0 0.0
  %310 = vmatpush1.msra.mxu0 0.0
  %311 = vmatprep.subr.mxu0 0.0
  %312 = vmatpush1.msra.mxu0 0.0
  %313 = vmatprep.subr.mxu0 0.0
  %314 = vmatpush1.msra.mxu0 0.0
  %315 = vmatprep.subr.mxu0 0.0
  %316 = vmatpush1.msra.mxu0 0.0
  %317 = vmatprep.subr.mxu0 0.0
  %318 = vmatpush1.msra.mxu0 0.0
  %319 = vmatprep.subr.mxu0 0.0
  %320 = vmatpush1.msra.mxu0 0.0
  %321 = vmatprep.subr.mxu0 0.0
  %322 = vmatpush1.msra.mxu0 0.0
  %323 = vmatprep.subr.mxu0 0.0
  %324 = vmatpush1.msra.mxu0 0.0
  %325 = vmatprep.subr.mxu0 0.0
  %326 = vmatpush1.msra.mxu0 0.0
  %327 = vmatprep.subr.mxu0 0.0
  %328 = vmatpush1.msra.mxu0 0.0
  %329 = vmatprep.subr.mxu0 0.0
  %330 = vmatpush1.msra.mxu0 0.0
  %331 = vmatprep.subr.mxu0 0.0
  %332 = vmatpush1.msra.mxu0 0.0
  %333 = vmatprep.subr.mxu0 0.0
  %334 = vmatpush1.msra.mxu0 0.0
  %335 = vmatprep.subr.mxu0 0.0
  %336 = vmatpush1.msra.mxu0 0.0
  %337 = vmatprep.subr.mxu0 0.0
  %338 = vmatpush1.msra.mxu0 0.0
  %339 = vmatprep.subr.mxu0 0.0
  %340 = vmatpush1.msra.mxu0 0.0
  %341 = vmatprep.subr.mxu0 0.0
  %342 = vmatpush1.msra.mxu0 0.0
  %343 = vmatprep.subr.mxu0 0.0
  %344 = vmatpush1.msra.mxu0 0.0
  %345 = vmatprep.mubr.f32.mxu0 0.0
  %346 = vmatmul.mubr.f32.gmra.mrb[0].mxu0 %v279
  %v347 = vpop.f32.mrb[0].mxu0
  %v348 = vadd.f32 0.0, %v347
  %v349 = vpop.f32.mrb[0].mxu0
  %350 = vdwg.mxu0
  %v351 = vadd.f32 %v140, %v348
  %v352 = vxor.u32 %v351, 2147483648
  %v353 = vmul.f32 %v352, 1.442695
  %v354 = vpow.pop %v353
  %v355 = vadd.f32 %v354, 1.0
  %v356 = vrcp.pop %v355
  %v357 = vmul.f32 1.0, %v356
  %v358 = vtanh.pop %v351
  %v359 = vmul.f32 %v357, %v269
  %361 = vrot.lane.b32.xlu0 %v358, 64
  %v362 = vpop.permute.xlu0 %361
  %v364 = vmul.f32 %v357, %v362
  %366 = vrot.lane.b32.xlu0 %v364, 32
  %v367 = vpop.permute.xlu0 %366
  %v369 = vadd.f32 %v359, %v367
  %v370 = vtanh.pop %v369
  %372 = vrot.lane.b32.xlu0 %v370, 64
  %v373 = vpop.permute.xlu0 %372
  %v375 = vmul.f32 %v357, %v373
  %377 = vrot.lane.b32.xlu0 %v375, 32
  %v378 = vpop.permute.xlu0 %377
  %v379 = vsel %vm177, %v378, 0
  %381 = vmatprep.subr.mxu0 0.0
  %382 = vmatpush1.msra.mxu0 %v173
  %383 = vmatprep.subr.mxu0 0.0
  %384 = vmatpush1.msra.mxu0 %v174
  %385 = vmatprep.subr.mxu0 0.0
  %386 = vmatpush1.msra.mxu0 %v175
  %387 = vmatprep.subr.mxu0 0.0
  %388 = vmatpush1.msra.mxu0 %v176
  %389 = vmatprep.subr.mxu0 0.0
  %390 = vmatpush1.msra.mxu0 0.0
  %391 = vmatprep.subr.mxu0 0.0
  %392 = vmatpush1.msra.mxu0 0.0
  %393 = vmatprep.subr.mxu0 0.0
  %394 = vmatpush1.msra.mxu0 0.0
  %395 = vmatprep.subr.mxu0 0.0
  %396 = vmatpush1.msra.mxu0 0.0
  %397 = vmatprep.subr.mxu0 0.0
  %398 = vmatpush1.msra.mxu0 0.0
  %399 = vmatprep.subr.mxu0 0.0
  %400 = vmatpush1.msra.mxu0 0.0
  %401 = vmatprep.subr.mxu0 0.0
  %402 = vmatpush1.msra.mxu0 0.0
  %403 = vmatprep.subr.mxu0 0.0
  %404 = vmatpush1.msra.mxu0 0.0
  %405 = vmatprep.subr.mxu0 0.0
  %406 = vmatpush1.msra.mxu0 0.0
  %407 = vmatprep.subr.mxu0 0.0
  %408 = vmatpush1.msra.mxu0 0.0
  %409 = vmatprep.subr.mxu0 0.0
  %410 = vmatpush1.msra.mxu0 0.0
  %411 = vmatprep.subr.mxu0 0.0
  %412 = vmatpush1.msra.mxu0 0.0
  %413 = vmatprep.subr.mxu0 0.0
  %414 = vmatpush1.msra.mxu0 0.0
  %415 = vmatprep.subr.mxu0 0.0
  %416 = vmatpush1.msra.mxu0 0.0
  %417 = vmatprep.subr.mxu0 0.0
  %418 = vmatpush1.msra.mxu0 0.0
  %419 = vmatprep.subr.mxu0 0.0
  %420 = vmatpush1.msra.mxu0 0.0
  %421 = vmatprep.subr.mxu0 0.0
  %422 = vmatpush1.msra.mxu0 0.0
  %423 = vmatprep.subr.mxu0 0.0
  %424 = vmatpush1.msra.mxu0 0.0
  %425 = vmatprep.subr.mxu0 0.0
  %426 = vmatpush1.msra.mxu0 0.0
  %427 = vmatprep.subr.mxu0 0.0
  %428 = vmatpush1.msra.mxu0 0.0
  %429 = vmatprep.subr.mxu0 0.0
  %430 = vmatpush1.msra.mxu0 0.0
  %431 = vmatprep.subr.mxu0 0.0
  %432 = vmatpush1.msra.mxu0 0.0
  %433 = vmatprep.subr.mxu0 0.0
  %434 = vmatpush1.msra.mxu0 0.0
  %435 = vmatprep.subr.mxu0 0.0
  %436 = vmatpush1.msra.mxu0 0.0
  %437 = vmatprep.subr.mxu0 0.0
  %438 = vmatpush1.msra.mxu0 0.0
  %439 = vmatprep.subr.mxu0 0.0
  %440 = vmatpush1.msra.mxu0 0.0
  %441 = vmatprep.subr.mxu0 0.0
  %442 = vmatpush1.msra.mxu0 0.0
  %443 = vmatprep.subr.mxu0 0.0
  %444 = vmatpush1.msra.mxu0 0.0
  %445 = vmatprep.mubr.f32.mxu0 0.0
  %446 = vmatmul.mubr.f32.gmra.mrb[0].mxu0 %v379
  %v447 = vpop.f32.mrb[0].mxu0
  %v448 = vadd.f32 0.0, %v447
  %v449 = vpop.f32.mrb[0].mxu0
  %450 = vdwg.mxu0
  %v451 = vadd.f32 %v145, %v448
  %v452 = vxor.u32 %v451, 2147483648
  %v453 = vmul.f32 %v452, 1.442695
  %v454 = vpow.pop %v453
  %v455 = vadd.f32 %v454, 1.0
  %v456 = vrcp.pop %v455
  %v457 = vmul.f32 1.0, %v456
  %v458 = vtanh.pop %v451
  %v459 = vmul.f32 %v457, %v369
  %461 = vrot.lane.b32.xlu0 %v458, 64
  %v462 = vpop.permute.xlu0 %461
  %v464 = vmul.f32 %v457, %v462
  %466 = vrot.lane.b32.xlu0 %v464, 32
  %v467 = vpop.permute.xlu0 %466
  %v469 = vadd.f32 %v459, %v467
  %v470 = vtanh.pop %v469
  %472 = vrot.lane.b32.xlu0 %v470, 64
  %v473 = vpop.permute.xlu0 %472
  %v475 = vmul.f32 %v457, %v473
  %477 = vrot.lane.b32.xlu0 %v475, 32
  %v478 = vpop.permute.xlu0 %477
  %v479 = vsel %vm177, %v478, 0
  %481 = vmatprep.subr.mxu0 0.0
  %482 = vmatpush1.msra.mxu0 %v173
  %483 = vmatprep.subr.mxu0 0.0
  %484 = vmatpush1.msra.mxu0 %v174
  %485 = vmatprep.subr.mxu0 0.0
  %486 = vmatpush1.msra.mxu0 %v175
  %487 = vmatprep.subr.mxu0 0.0
  %488 = vmatpush1.msra.mxu0 %v176
  %489 = vmatprep.subr.mxu0 0.0
  %490 = vmatpush1.msra.mxu0 0.0
  %491 = vmatprep.subr.mxu0 0.0
  %492 = vmatpush1.msra.mxu0 0.0
  %493 = vmatprep.subr.mxu0 0.0
  %494 = vmatpush1.msra.mxu0 0.0
  %495 = vmatprep.subr.mxu0 0.0
  %496 = vmatpush1.msra.mxu0 0.0
  %497 = vmatprep.subr.mxu0 0.0
  %498 = vmatpush1.msra.mxu0 0.0
  %499 = vmatprep.subr.mxu0 0.0
  %500 = vmatpush1.msra.mxu0 0.0
  %501 = vmatprep.subr.mxu0 0.0
  %502 = vmatpush1.msra.mxu0 0.0
  %503 = vmatprep.subr.mxu0 0.0
  %504 = vmatpush1.msra.mxu0 0.0
  %505 = vmatprep.subr.mxu0 0.0
  %506 = vmatpush1.msra.mxu0 0.0
  %507 = vmatprep.subr.mxu0 0.0
  %508 = vmatpush1.msra.mxu0 0.0
  %509 = vmatprep.subr.mxu0 0.0
  %510 = vmatpush1.msra.mxu0 0.0
  %511 = vmatprep.subr.mxu0 0.0
  %512 = vmatpush1.msra.mxu0 0.0
  %513 = vmatprep.subr.mxu0 0.0
  %514 = vmatpush1.msra.mxu0 0.0
  %515 = vmatprep.subr.mxu0 0.0
  %516 = vmatpush1.msra.mxu0 0.0
  %517 = vmatprep.subr.mxu0 0.0
  %518 = vmatpush1.msra.mxu0 0.0
  %519 = vmatprep.subr.mxu0 0.0
  %520 = vmatpush1.msra.mxu0 0.0
  %521 = vmatprep.subr.mxu0 0.0
  %522 = vmatpush1.msra.mxu0 0.0
  %523 = vmatprep.subr.mxu0 0.0
  %524 = vmatpush1.msra.mxu0 0.0
  %525 = vmatprep.subr.mxu0 0.0
  %526 = vmatpush1.msra.mxu0 0.0
  %527 = vmatprep.subr.mxu0 0.0
  %528 = vmatpush1.msra.mxu0 0.0
  %529 = vmatprep.subr.mxu0 0.0
  %530 = vmatpush1.msra.mxu0 0.0
  %531 = vmatprep.subr.mxu0 0.0
  %532 = vmatpush1.msra.mxu0 0.0
  %533 = vmatprep.subr.mxu0 0.0
  %534 = vmatpush1.msra.mxu0 0.0
  %535 = vmatprep.subr.mxu0 0.0
  %536 = vmatpush1.msra.mxu0 0.0
  %537 = vmatprep.subr.mxu0 0.0
  %538 = vmatpush1.msra.mxu0 0.0
  %539 = vmatprep.subr.mxu0 0.0
  %540 = vmatpush1.msra.mxu0 0.0
  %541 = vmatprep.subr.mxu0 0.0
  %542 = vmatpush1.msra.mxu0 0.0
  %543 = vmatprep.subr.mxu0 0.0
  %544 = vmatpush1.msra.mxu0 0.0
  %545 = vmatprep.mubr.f32.mxu0 0.0
  %546 = vmatmul.mubr.f32.gmra.mrb[0].mxu0 %v479
  %v547 = vpop.f32.mrb[0].mxu0
  %v548 = vadd.f32 0.0, %v547
  %v549 = vpop.f32.mrb[0].mxu0
  %550 = vdwg.mxu0
  %v551 = vadd.f32 %v150, %v548
  %v552 = vxor.u32 %v551, 2147483648
  %v553 = vmul.f32 %v552, 1.442695
  %v554 = vpow.pop %v553
  %v555 = vadd.f32 %v554, 1.0
  %v556 = vrcp.pop %v555
  %v557 = vmul.f32 1.0, %v556
  %v558 = vtanh.pop %v551
  %v559 = vmul.f32 %v557, %v469
  %561 = vrot.lane.b32.xlu0 %v558, 64
  %v562 = vpop.permute.xlu0 %561
  %v564 = vmul.f32 %v557, %v562
  %566 = vrot.lane.b32.xlu0 %v564, 32
  %v567 = vpop.permute.xlu0 %566
  %v569 = vadd.f32 %v559, %v567
  %v570 = vtanh.pop %v569
  %572 = vrot.lane.b32.xlu0 %v570, 64
  %v573 = vpop.permute.xlu0 %572
  %v575 = vmul.f32 %v557, %v573
  %577 = vrot.lane.b32.xlu0 %v575, 32
  %v578 = vpop.permute.xlu0 %577
  %v579 = vsel %vm177, %v578, 0
  %581 = vmatprep.subr.mxu0 0.0
  %582 = vmatpush1.msra.mxu0 %v173
  %583 = vmatprep.subr.mxu0 0.0
  %584 = vmatpush1.msra.mxu0 %v174
  %585 = vmatprep.subr.mxu0 0.0
  %586 = vmatpush1.msra.mxu0 %v175
  %587 = vmatprep.subr.mxu0 0.0
  %588 = vmatpush1.msra.mxu0 %v176
  %589 = vmatprep.subr.mxu0 0.0
  %590 = vmatpush1.msra.mxu0 0.0
  %591 = vmatprep.subr.mxu0 0.0
  %592 = vmatpush1.msra.mxu0 0.0
  %593 = vmatprep.subr.mxu0 0.0
  %594 = vmatpush1.msra.mxu0 0.0
  %595 = vmatprep.subr.mxu0 0.0
  %596 = vmatpush1.msra.mxu0 0.0
  %597 = vmatprep.subr.mxu0 0.0
  %598 = vmatpush1.msra.mxu0 0.0
  %599 = vmatprep.subr.mxu0 0.0
  %600 = vmatpush1.msra.mxu0 0.0
  %601 = vmatprep.subr.mxu0 0.0
  %602 = vmatpush1.msra.mxu0 0.0
  %603 = vmatprep.subr.mxu0 0.0
  %604 = vmatpush1.msra.mxu0 0.0
  %605 = vmatprep.subr.mxu0 0.0
  %606 = vmatpush1.msra.mxu0 0.0
  %607 = vmatprep.subr.mxu0 0.0
  %608 = vmatpush1.msra.mxu0 0.0
  %609 = vmatprep.subr.mxu0 0.0
  %610 = vmatpush1.msra.mxu0 0.0
  %611 = vmatprep.subr.mxu0 0.0
  %612 = vmatpush1.msra.mxu0 0.0
  %613 = vmatprep.subr.mxu0 0.0
  %614 = vmatpush1.msra.mxu0 0.0
  %615 = vmatprep.subr.mxu0 0.0
  %616 = vmatpush1.msra.mxu0 0.0
  %617 = vmatprep.subr.mxu0 0.0
  %618 = vmatpush1.msra.mxu0 0.0
  %619 = vmatprep.subr.mxu0 0.0
  %620 = vmatpush1.msra.mxu0 0.0
  %621 = vmatprep.subr.mxu0 0.0
  %622 = vmatpush1.msra.mxu0 0.0
  %623 = vmatprep.subr.mxu0 0.0
  %624 = vmatpush1.msra.mxu0 0.0
  %625 = vmatprep.subr.mxu0 0.0
  %626 = vmatpush1.msra.mxu0 0.0
  %627 = vmatprep.subr.mxu0 0.0
  %628 = vmatpush1.msra.mxu0 0.0
  %629 = vmatprep.subr.mxu0 0.0
  %630 = vmatpush1.msra.mxu0 0.0
  %631 = vmatprep.subr.mxu0 0.0
  %632 = vmatpush1.msra.mxu0 0.0
  %633 = vmatprep.subr.mxu0 0.0
  %634 = vmatpush1.msra.mxu0 0.0
  %635 = vmatprep.subr.mxu0 0.0
  %636 = vmatpush1.msra.mxu0 0.0
  %637 = vmatprep.subr.mxu0 0.0
  %638 = vmatpush1.msra.mxu0 0.0
  %639 = vmatprep.subr.mxu0 0.0
  %640 = vmatpush1.msra.mxu0 0.0
  %641 = vmatprep.subr.mxu0 0.0
  %642 = vmatpush1.msra.mxu0 0.0
  %643 = vmatprep.subr.mxu0 0.0
  %644 = vmatpush1.msra.mxu0 0.0
  %645 = vmatprep.mubr.f32.mxu0 0.0
  %646 = vmatmul.mubr.f32.gmra.mrb[0].mxu0 %v579
  %v647 = vpop.f32.mrb[0].mxu0
  %v648 = vadd.f32 0.0, %v647
  %v649 = vpop.f32.mrb[0].mxu0
  %650 = vdwg.mxu0
  %v651 = vadd.f32 %v155, %v648
  %v652 = vxor.u32 %v651, 2147483648
  %v653 = vmul.f32 %v652, 1.442695
  %v654 = vpow.pop %v653
  %v655 = vadd.f32 %v654, 1.0
  %v656 = vrcp.pop %v655
  %v657 = vmul.f32 1.0, %v656
  %v658 = vtanh.pop %v651
  %v659 = vmul.f32 %v657, %v569
  %661 = vrot.lane.b32.xlu0 %v658, 64
  %v662 = vpop.permute.xlu0 %661
  %v664 = vmul.f32 %v657, %v662
  %666 = vrot.lane.b32.xlu0 %v664, 32
  %v667 = vpop.permute.xlu0 %666
  %v669 = vadd.f32 %v659, %v667
  %v670 = vtanh.pop %v669
  %672 = vrot.lane.b32.xlu0 %v670, 64
  %v673 = vpop.permute.xlu0 %672
  %v675 = vmul.f32 %v657, %v673
  %677 = vrot.lane.b32.xlu0 %v675, 32
  %v678 = vpop.permute.xlu0 %677
  %v679 = vsel %vm177, %v678, 0
  %681 = vmatprep.subr.mxu0 0.0
  %682 = vmatpush1.msra.mxu0 %v173
  %683 = vmatprep.subr.mxu0 0.0
  %684 = vmatpush1.msra.mxu0 %v174
  %685 = vmatprep.subr.mxu0 0.0
  %686 = vmatpush1.msra.mxu0 %v175
  %687 = vmatprep.subr.mxu0 0.0
  %688 = vmatpush1.msra.mxu0 %v176
  %689 = vmatprep.subr.mxu0 0.0
  %690 = vmatpush1.msra.mxu0 0.0
  %691 = vmatprep.subr.mxu0 0.0
  %692 = vmatpush1.msra.mxu0 0.0
  %693 = vmatprep.subr.mxu0 0.0
  %694 = vmatpush1.msra.mxu0 0.0
  %695 = vmatprep.subr.mxu0 0.0
  %696 = vmatpush1.msra.mxu0 0.0
  %697 = vmatprep.subr.mxu0 0.0
  %698 = vmatpush1.msra.mxu0 0.0
  %699 = vmatprep.subr.mxu0 0.0
  %700 = vmatpush1.msra.mxu0 0.0
  %701 = vmatprep.subr.mxu0 0.0
  %702 = vmatpush1.msra.mxu0 0.0
  %703 = vmatprep.subr.mxu0 0.0
  %704 = vmatpush1.msra.mxu0 0.0
  %705 = vmatprep.subr.mxu0 0.0
  %706 = vmatpush1.msra.mxu0 0.0
  %707 = vmatprep.subr.mxu0 0.0
  %708 = vmatpush1.msra.mxu0 0.0
  %709 = vmatprep.subr.mxu0 0.0
  %710 = vmatpush1.msra.mxu0 0.0
  %711 = vmatprep.subr.mxu0 0.0
  %712 = vmatpush1.msra.mxu0 0.0
  %713 = vmatprep.subr.mxu0 0.0
  %714 = vmatpush1.msra.mxu0 0.0
  %715 = vmatprep.subr.mxu0 0.0
  %716 = vmatpush1.msra.mxu0 0.0
  %717 = vmatprep.subr.mxu0 0.0
  %718 = vmatpush1.msra.mxu0 0.0
  %719 = vmatprep.subr.mxu0 0.0
  %720 = vmatpush1.msra.mxu0 0.0
  %721 = vmatprep.subr.mxu0 0.0
  %722 = vmatpush1.msra.mxu0 0.0
  %723 = vmatprep.subr.mxu0 0.0
  %724 = vmatpush1.msra.mxu0 0.0
  %725 = vmatprep.subr.mxu0 0.0
  %726 = vmatpush1.msra.mxu0 0.0
  %727 = vmatprep.subr.mxu0 0.0
  %728 = vmatpush1.msra.mxu0 0.0
  %729 = vmatprep.subr.mxu0 0.0
  %730 = vmatpush1.msra.mxu0 0.0
  %731 = vmatprep.subr.mxu0 0.0
  %732 = vmatpush1.msra.mxu0 0.0
  %733 = vmatprep.subr.mxu0 0.0
  %734 = vmatpush1.msra.mxu0 0.0
  %735 = vmatprep.subr.mxu0 0.0
  %736 = vmatpush1.msra.mxu0 0.0
  %737 = vmatprep.subr.mxu0 0.0
  %738 = vmatpush1.msra.mxu0 0.0
  %739 = vmatprep.subr.mxu0 0.0
  %740 = vmatpush1.msra.mxu0 0.0
  %741 = vmatprep.subr.mxu0 0.0
  %742 = vmatpush1.msra.mxu0 0.0
  %743 = vmatprep.subr.mxu0 0.0
  %744 = vmatpush1.msra.mxu0 0.0
  %745 = vmatprep.mubr.f32.mxu0 0.0
  %746 = vmatmul.mubr.f32.gmra.mrb[0].mxu0 %v679
  %v747 = vpop.f32.mrb[0].mxu0
  %v748 = vadd.f32 0.0, %v747
  %v749 = vpop.f32.mrb[0].mxu0
  %750 = vdwg.mxu0
  %v751 = vadd.f32 %v160, %v748
  %v752 = vxor.u32 %v751, 2147483648
  %v753 = vmul.f32 %v752, 1.442695
  %v754 = vpow.pop %v753
  %v755 = vadd.f32 %v754, 1.0
  %v756 = vrcp.pop %v755
  %v757 = vmul.f32 1.0, %v756
  %v758 = vtanh.pop %v751
  %v759 = vmul.f32 %v757, %v669
  %761 = vrot.lane.b32.xlu0 %v758, 64
  %v762 = vpop.permute.xlu0 %761
  %v764 = vmul.f32 %v757, %v762
  %766 = vrot.lane.b32.xlu0 %v764, 32
  %v767 = vpop.permute.xlu0 %766
  %v769 = vadd.f32 %v759, %v767
  %v770 = vtanh.pop %v769
  %772 = vrot.lane.b32.xlu0 %v770, 64
  %v773 = vpop.permute.xlu0 %772
  %v775 = vmul.f32 %v757, %v773
  %777 = vrot.lane.b32.xlu0 %v775, 32
  %v778 = vpop.permute.xlu0 %777
  %v779 = vsel %vm177, %v778, 0
  %781 = vmatprep.subr.mxu0 0.0
  %782 = vmatpush1.msra.mxu0 %v173
  %783 = vmatprep.subr.mxu0 0.0
  %784 = vmatpush1.msra.mxu0 %v174
  %785 = vmatprep.subr.mxu0 0.0
  %786 = vmatpush1.msra.mxu0 %v175
  %787 = vmatprep.subr.mxu0 0.0
  %788 = vmatpush1.msra.mxu0 %v176
  %789 = vmatprep.subr.mxu0 0.0
  %790 = vmatpush1.msra.mxu0 0.0
  %791 = vmatprep.subr.mxu0 0.0
  %792 = vmatpush1.msra.mxu0 0.0
  %793 = vmatprep.subr.mxu0 0.0
  %794 = vmatpush1.msra.mxu0 0.0
  %795 = vmatprep.subr.mxu0 0.0
  %796 = vmatpush1.msra.mxu0 0.0
  %797 = vmatprep.subr.mxu0 0.0
  %798 = vmatpush1.msra.mxu0 0.0
  %799 = vmatprep.subr.mxu0 0.0
  %800 = vmatpush1.msra.mxu0 0.0
  %801 = vmatprep.subr.mxu0 0.0
  %802 = vmatpush1.msra.mxu0 0.0
  %803 = vmatprep.subr.mxu0 0.0
  %804 = vmatpush1.msra.mxu0 0.0
  %805 = vmatprep.subr.mxu0 0.0
  %806 = vmatpush1.msra.mxu0 0.0
  %807 = vmatprep.subr.mxu0 0.0
  %808 = vmatpush1.msra.mxu0 0.0
  %809 = vmatprep.subr.mxu0 0.0
  %810 = vmatpush1.msra.mxu0 0.0
  %811 = vmatprep.subr.mxu0 0.0
  %812 = vmatpush1.msra.mxu0 0.0
  %813 = vmatprep.subr.mxu0 0.0
  %814 = vmatpush1.msra.mxu0 0.0
  %815 = vmatprep.subr.mxu0 0.0
  %816 = vmatpush1.msra.mxu0 0.0
  %817 = vmatprep.subr.mxu0 0.0
  %818 = vmatpush1.msra.mxu0 0.0
  %819 = vmatprep.subr.mxu0 0.0
  %820 = vmatpush1.msra.mxu0 0.0
  %821 = vmatprep.subr.mxu0 0.0
  %822 = vmatpush1.msra.mxu0 0.0
  %823 = vmatprep.subr.mxu0 0.0
  %824 = vmatpush1.msra.mxu0 0.0
  %825 = vmatprep.subr.mxu0 0.0
  %826 = vmatpush1.msra.mxu0 0.0
  %827 = vmatprep.subr.mxu0 0.0
  %828 = vmatpush1.msra.mxu0 0.0
  %829 = vmatprep.subr.mxu0 0.0
  %830 = vmatpush1.msra.mxu0 0.0
  %831 = vmatprep.subr.mxu0 0.0
  %832 = vmatpush1.msra.mxu0 0.0
  %833 = vmatprep.subr.mxu0 0.0
  %834 = vmatpush1.msra.mxu0 0.0
  %835 = vmatprep.subr.mxu0 0.0
  %836 = vmatpush1.msra.mxu0 0.0
  %837 = vmatprep.subr.mxu0 0.0
  %838 = vmatpush1.msra.mxu0 0.0
  %839 = vmatprep.subr.mxu0 0.0
  %840 = vmatpush1.msra.mxu0 0.0
  %841 = vmatprep.subr.mxu0 0.0
  %842 = vmatpush1.msra.mxu0 0.0
  %843 = vmatprep.subr.mxu0 0.0
  %844 = vmatpush1.msra.mxu0 0.0
  %845 = vmatprep.mubr.f32.mxu0 0.0
  %846 = vmatmul.mubr.f32.gmra.mrb[0].mxu0 %v779
  %v847 = vpop.f32.mrb[0].mxu0
  %v848 = vadd.f32 0.0, %v847
  %v849 = vpop.f32.mrb[0].mxu0
  %850 = vdwg.mxu0
  %v851 = vadd.f32 %v165, %v848
  %v852 = vxor.u32 %v851, 2147483648
  %v853 = vmul.f32 %v852, 1.442695
  %v854 = vpow.pop %v853
  %v855 = vadd.f32 %v854, 1.0
  %v856 = vrcp.pop %v855
  %v857 = vmul.f32 1.0, %v856
  %v858 = vtanh.pop %v851
  %v859 = vmul.f32 %v857, %v769
  %861 = vrot.lane.b32.xlu0 %v858, 64
  %v862 = vpop.permute.xlu0 %861
  %v864 = vmul.f32 %v857, %v862
  %866 = vrot.lane.b32.xlu0 %v864, 32
  %v867 = vpop.permute.xlu0 %866
  %v869 = vadd.f32 %v859, %v867
  %v870 = vtanh.pop %v869
  %872 = vrot.lane.b32.xlu0 %v870, 64
  %v873 = vpop.permute.xlu0 %872
  %v875 = vmul.f32 %v857, %v873
  %877 = vrot.lane.b32.xlu0 %v875, 32
  %v878 = vpop.permute.xlu0 %877
  %v879 = vsel %vm177, %v878, 0
  %881 = vmatprep.subr.mxu0 0.0
  %882 = vmatpush1.msra.mxu0 %v173
  %883 = vmatprep.subr.mxu0 0.0
  %884 = vmatpush1.msra.mxu0 %v174
  %885 = vmatprep.subr.mxu0 0.0
  %886 = vmatpush1.msra.mxu0 %v175
  %887 = vmatprep.subr.mxu0 0.0
  %888 = vmatpush1.msra.mxu0 %v176
  %889 = vmatprep.subr.mxu0 0.0
  %890 = vmatpush1.msra.mxu0 0.0
  %891 = vmatprep.subr.mxu0 0.0
  %892 = vmatpush1.msra.mxu0 0.0
  %893 = vmatprep.subr.mxu0 0.0
  %894 = vmatpush1.msra.mxu0 0.0
  %895 = vmatprep.subr.mxu0 0.0
  %896 = vmatpush1.msra.mxu0 0.0
  %897 = vmatprep.subr.mxu0 0.0
  %898 = vmatpush1.msra.mxu0 0.0
  %899 = vmatprep.subr.mxu0 0.0
  %900 = vmatpush1.msra.mxu0 0.0
  %901 = vmatprep.subr.mxu0 0.0
  %902 = vmatpush1.msra.mxu0 0.0
  %903 = vmatprep.subr.mxu0 0.0
  %904 = vmatpush1.msra.mxu0 0.0
  %905 = vmatprep.subr.mxu0 0.0
  %906 = vmatpush1.msra.mxu0 0.0
  %907 = vmatprep.subr.mxu0 0.0
  %908 = vmatpush1.msra.mxu0 0.0
  %909 = vmatprep.subr.mxu0 0.0
  %910 = vmatpush1.msra.mxu0 0.0
  %911 = vmatprep.subr.mxu0 0.0
  %912 = vmatpush1.msra.mxu0 0.0
  %913 = vmatprep.subr.mxu0 0.0
  %914 = vmatpush1.msra.mxu0 0.0
  %915 = vmatprep.subr.mxu0 0.0
  %916 = vmatpush1.msra.mxu0 0.0
  %917 = vmatprep.subr.mxu0 0.0
  %918 = vmatpush1.msra.mxu0 0.0
  %919 = vmatprep.subr.mxu0 0.0
  %920 = vmatpush1.msra.mxu0 0.0
  %921 = vmatprep.subr.mxu0 0.0
  %922 = vmatpush1.msra.mxu0 0.0
  %923 = vmatprep.subr.mxu0 0.0
  %924 = vmatpush1.msra.mxu0 0.0
  %925 = vmatprep.subr.mxu0 0.0
  %926 = vmatpush1.msra.mxu0 0.0
  %927 = vmatprep.subr.mxu0 0.0
  %928 = vmatpush1.msra.mxu0 0.0
  %929 = vmatprep.subr.mxu0 0.0
  %930 = vmatpush1.msra.mxu0 0.0
  %931 = vmatprep.subr.mxu0 0.0
  %932 = vmatpush1.msra.mxu0 0.0
  %933 = vmatprep.subr.mxu0 0.0
  %934 = vmatpush1.msra.mxu0 0.0
  %935 = vmatprep.subr.mxu0 0.0
  %936 = vmatpush1.msra.mxu0 0.0
  %937 = vmatprep.subr.mxu0 0.0
  %938 = vmatpush1.msra.mxu0 0.0
  %939 = vmatprep.subr.mxu0 0.0
  %940 = vmatpush1.msra.mxu0 0.0
  %941 = vmatprep.subr.mxu0 0.0
  %942 = vmatpush1.msra.mxu0 0.0
  %943 = vmatprep.subr.mxu0 0.0
  %944 = vmatpush1.msra.mxu0 0.0
  %945 = vmatprep.mubr.f32.mxu0 0.0
  %946 = vmatmul.mubr.f32.gmra.mrb[0].mxu0 %v879
  %v947 = vpop.f32.mrb[0].mxu0
  %v948 = vadd.f32 0.0, %v947
  %v949 = vpop.f32.mrb[0].mxu0
  %950 = vdwg.mxu0
  %v951 = vadd.f32 %v170, %v948
  %v952 = vxor.u32 %v951, 2147483648
  %v953 = vmul.f32 %v952, 1.442695
  %v954 = vpow.pop %v953
  %v955 = vadd.f32 %v954, 1.0
  %v956 = vrcp.pop %v955
  %v957 = vmul.f32 1.0, %v956
  %v958 = vtanh.pop %v951
  %v959 = vmul.f32 %v957, %v869
  %961 = vrot.lane.b32.xlu0 %v958, 64
  %v962 = vpop.permute.xlu0 %961
  %v964 = vmul.f32 %v957, %v962
  %966 = vrot.lane.b32.xlu0 %v964, 32
  %v967 = vpop.permute.xlu0 %966
  %v969 = vadd.f32 %v959, %v967
  %v970 = vtanh.pop %v969
  %972 = vrot.lane.b32.xlu0 %v970, 64
  %v973 = vpop.permute.xlu0 %972
  %v975 = vmul.f32 %v957, %v973
  %v976 = vmax.f32 %v975, 0.0
  %v977 = vld [vmem:[%s4] sm:$0xff]
  %v978 = vld [vmem:[%s4 + $0x8] sm:$0xff]
  %v979 = vld [vmem:[%s4 + $0x10] sm:$0xff]
  %v980 = vld [vmem:[%s4 + $0x18] sm:$0xff]
  %v981 = vld [vmem:[%s5] sm:$0x1]
  %v983 = vlaneseq
  %v984 = vshrl.u32 %v983, 7
  %v985 = vsub.s32 0, %v984
  %v986 = vrot.slane %v981, %v985
  %989 = vrot.lane.b32.xlu0 %v976, 32
  %v990 = vpop.permute.xlu0 %989
  %v991 = vsel %vm177, %v990, 0
  %993 = vmatprep.subr.mxu0 0.0
  %994 = vmatpush1.msra.mxu0 %v977
  %995 = vmatprep.subr.mxu0 0.0
  %996 = vmatpush1.msra.mxu0 %v978
  %997 = vmatprep.subr.mxu0 0.0
  %998 = vmatpush1.msra.mxu0 %v979
  %999 = vmatprep.subr.mxu0 0.0
  %1000 = vmatpush1.msra.mxu0 %v980
  %1001 = vmatprep.subr.mxu0 0.0
  %1002 = vmatpush1.msra.mxu0 0.0
  %1003 = vmatprep.subr.mxu0 0.0
  %1004 = vmatpush1.msra.mxu0 0.0
  %1005 = vmatprep.subr.mxu0 0.0
  %1006 = vmatpush1.msra.mxu0 0.0
  %1007 = vmatprep.subr.mxu0 0.0
  %1008 = vmatpush1.msra.mxu0 0.0
  %1009 = vmatprep.subr.mxu0 0.0
  %1010 = vmatpush1.msra.mxu0 0.0
  %1011 = vmatprep.subr.mxu0 0.0
  %1012 = vmatpush1.msra.mxu0 0.0
  %1013 = vmatprep.subr.mxu0 0.0
  %1014 = vmatpush1.msra.mxu0 0.0
  %1015 = vmatprep.subr.mxu0 0.0
  %1016 = vmatpush1.msra.mxu0 0.0
  %1017 = vmatprep.subr.mxu0 0.0
  %1018 = vmatpush1.msra.mxu0 0.0
  %1019 = vmatprep.subr.mxu0 0.0
  %1020 = vmatpush1.msra.mxu0 0.0
  %1021 = vmatprep.subr.mxu0 0.0
  %1022 = vmatpush1.msra.mxu0 0.0
  %1023 = vmatprep.subr.mxu0 0.0
  %1024 = vmatpush1.msra.mxu0 0.0
  %1025 = vmatprep.subr.mxu0 0.0
  %1026 = vmatpush1.msra.mxu0 0.0
  %1027 = vmatprep.subr.mxu0 0.0
  %1028 = vmatpush1.msra.mxu0 0.0
  %1029 = vmatprep.subr.mxu0 0.0
  %1030 = vmatpush1.msra.mxu0 0.0
  %1031 = vmatprep.subr.mxu0 0.0
  %1032 = vmatpush1.msra.mxu0 0.0
  %1033 = vmatprep.subr.mxu0 0.0
  %1034 = vmatpush1.msra.mxu0 0.0
  %1035 = vmatprep.subr.mxu0 0.0
  %1036 = vmatpush1.msra.mxu0 0.0
  %1037 = vmatprep.subr.mxu0 0.0
  %1038 = vmatpush1.msra.mxu0 0.0
  %1039 = vmatprep.subr.mxu0 0.0
  %1040 = vmatpush1.msra.mxu0 0.0
  %1041 = vmatprep.subr.mxu0 0.0
  %1042 = vmatpush1.msra.mxu0 0.0
  %1043 = vmatprep.subr.mxu0 0.0
  %1044 = vmatpush1.msra.mxu0 0.0
  %1045 = vmatprep.subr.mxu0 0.0
  %1046 = vmatpush1.msra.mxu0 0.0
  %1047 = vmatprep.subr.mxu0 0.0
  %1048 = vmatpush1.msra.mxu0 0.0
  %1049 = vmatprep.subr.mxu0 0.0
  %1050 = vmatpush1.msra.mxu0 0.0
  %1051 = vmatprep.subr.mxu0 0.0
  %1052 = vmatpush1.msra.mxu0 0.0
  %1053 = vmatprep.subr.mxu0 0.0
  %1054 = vmatpush1.msra.mxu0 0.0
  %1055 = vmatprep.subr.mxu0 0.0
  %1056 = vmatpush1.msra.mxu0 0.0
  %1057 = vmatprep.mubr.f32.mxu0 0.0
  %1058 = vmatmul.mubr.f32.gmra.mrb[0].mxu0 %v991
  %v1059 = vpop.f32.mrb[0].mxu0
  %v1060 = vadd.f32 %v986, %v1059
  %v1061 = vpop.f32.mrb[0].mxu0
  %1062 = vdwg.mxu0
  %1063 = vst.msk [vmem:[%s6] sm:$0xff] %vm39, %v1060
  // Predicated region
  $region26: #{tpu_custom_call.1} parent=0 // pred_check
    _
  $region27: #{tpu_custom_call.1} parent=0 // pred_check_branch
    %1065 = sbr.rel (0) target = $region29
  $region28: #{tpu_custom_call.1} parent=0 // pred_region
    _
  $region29: #{tpu_custom_call.1} parent=0 // pred_fallthru
    _
  // Predicated region
  $region30: #{tpu_custom_call.1} parent=0 // pred_check
    _
  $region31: #{tpu_custom_call.1} parent=0 // pred_check_branch
    %1067 = sbr.rel (0) target = $region33
  $region32: #{tpu_custom_call.1} parent=0 // pred_region
    _
  $region33: #{tpu_custom_call.1} parent=0 // pred_fallthru
    _

</llo_original>
